<compile_context>
chip_gen: v6e
topology: v6e:2x2x1
jax: 0.10.0
libtpu: 0.0.40
codegen_flags: <defaults>
</compile_context>

<pallas_src>
import functools

import jax
import jax.numpy as jnp
from jax import lax
from jax.experimental import pallas as pl
from jax.experimental.pallas import tpu as pltpu

_NUM_PARTIALS = 2          # leading "parallel" grid axis -> both TCs on v7x
_ACC_BLK = (1, 8, 128)     # (8,128)-aligned per-partial accumulator block


def _ls_kernel(pred_ref, tgt_ref, loss_ref, *, smooth_val, confidence):
    """Unweighted path: accumulate sum of per-row losses per partial."""
    @pl.when(pl.program_id(1) == 0)
    def _init():
        loss_ref[...] = jnp.zeros_like(loss_ref)

    x = pred_ref[...].astype(jnp.float32)          # (TN, C) logits
    t = tgt_ref[...]                               # (TN, 1) int32; -1 == padding
    C = x.shape[-1]

    # Row reductions only: max, logsumexp, and one fused coeff.x reduce.
    m = jnp.max(x, axis=-1, keepdims=True)
    lse = jnp.log(jnp.sum(jnp.exp(x - m), axis=-1, keepdims=True)) + m   # (TN,1)

    col = lax.broadcasted_iota(jnp.int32, (1, C), 1)       # hoisted (1, C) iota
    coeff = jnp.where(col == t, jnp.float32(confidence), jnp.float32(smooth_val))
    cx = jnp.sum(coeff * x, axis=-1, keepdims=True)        # (TN, 1)

    # -sum(true_dist * logp) = lse * sum(true_dist) - sum(true_dist * x)
    #                        = lse - cx              (coeff sums to 1 per row)
    per_loss = lse - cx
    valid = (t >= 0).astype(jnp.float32)                   # mask padded rows
    loss_ref[...] += jnp.sum(per_loss * valid)


def _ls_kernel_weighted(pred_ref, tgt_ref, w_ref, loss_ref, wsum_ref,
                        *, smooth_val, confidence):
    """Weighted path: also accumulate sum(weight[target])."""
    @pl.when(pl.program_id(1) == 0)
    def _init():
        loss_ref[...] = jnp.zeros_like(loss_ref)
        wsum_ref[...] = jnp.zeros_like(wsum_ref)

    x = pred_ref[...].astype(jnp.float32)          # (TN, C)
    t = tgt_ref[...]                               # (TN, 1)
    w = w_ref[...].astype(jnp.float32)             # (1, C)
    C = x.shape[-1]

    m = jnp.max(x, axis=-1, keepdims=True)
    lse = jnp.log(jnp.sum(jnp.exp(x - m), axis=-1, keepdims=True)) + m

    col = lax.broadcasted_iota(jnp.int32, (1, C), 1)
    eq = col == t
    coeff = jnp.where(eq, jnp.float32(confidence), jnp.float32(smooth_val))
    cx = jnp.sum(coeff * x, axis=-1, keepdims=True)
    wt = jnp.sum(jnp.where(eq, w, jnp.float32(0.0)), axis=-1, keepdims=True)
    # wt == weight[target]; 0 for padded rows (t == -1) so they drop out.

    per_loss = lse - cx
    loss_ref[...] += jnp.sum(per_loss * wt)
    wsum_ref[...] += jnp.sum(wt)


def _round_up(x, m):
    return ((x + m - 1) // m) * m


def _vmem_capacity_bytes():
    try:
        cap = getattr(pltpu.get_tpu_info(), "vmem_capacity_bytes", None)
        if cap:
            return int(cap)
    except Exception:
        pass
    return 64 << 20   # conservative fallback == v7x per-TC VMEM


def label_smoothing_loss(pred, target, classes, weight=None, smoothing=0.0,
                         block_n=None):
    """Matches LabelSmoothingLoss.forward: pred (N, C) float, target (N,) int."""
    N, C = pred.shape
    assert C == classes
    confidence = 1.0 - smoothing
    smooth_val = float(smoothing) / max(C - 1, 1)   # guard C == 1

    itemsize = jnp.dtype(pred.dtype).itemsize
    c_pad = _round_up(C, 128)                       # lane-padded width in VMEM
    sub = max(8, 32 // itemsize)                    # sublane granularity

    # Per-generation VMEM sizing: limit = 3/4 of physical (96 MiB on v5e/v6e,
    # 48 MiB on v7x); tiles sized against <= 80% of that; clamp block_n, never
    # the limit.
    vmem_cap = _vmem_capacity_bytes()
    vmem_limit = int(vmem_cap * 3 // 4)
    tile_budget = int(vmem_limit * 0.8)
    # Double-buffered lane-padded input slab + ~2 f32 intermediate copies
    # (covers bf16->f32 upcast, exp/coeff temps) + double-buffered lane-padded
    # (block_n, 1) target tile.
    per_row_bytes = c_pad * (2 * itemsize + 2 * 4) + 2 * 128 * 4
    max_block_n = max(sub, (tile_budget // per_row_bytes) // sub * sub)
    if block_n is None:
        block_n = max_block_n
    block_n = max(sub, min(int(block_n), max_block_n, 4096))
    block_n = (block_n // sub) * sub
    # Do not tile far beyond what one partial actually needs (limits padding).
    block_n = min(block_n, max(sub, _round_up(-(-N // _NUM_PARTIALS), sub)))

    n_pad = _round_up(N, _NUM_PARTIALS * block_n)
    steps_per = n_pad // (_NUM_PARTIALS * block_n)

    tgt = target.astype(jnp.int32)
    if n_pad != N:
        pred = jnp.pad(pred, ((0, n_pad - N), (0, 0)))
        tgt = jnp.pad(tgt, (0, n_pad - N), constant_values=-1)
    tgt2d = tgt.reshape(n_pad, 1)

    grid = (_NUM_PARTIALS, steps_per)
    compiler_params = pltpu.CompilerParams(
        dimension_semantics=("parallel", "arbitrary"),
        vmem_limit_bytes=vmem_limit)

    pred_spec = pl.BlockSpec((block_n, C), lambda p, i: (p * steps_per + i, 0))
    tgt_spec = pl.BlockSpec((block_n, 1), lambda p, i: (p * steps_per + i, 0))
    acc_shape = jax.ShapeDtypeStruct((_NUM_PARTIALS,) + _ACC_BLK[1:], jnp.float32)
    acc_spec = pl.BlockSpec(_ACC_BLK, lambda p, i: (p, 0, 0))

    if weight is None:
        kernel = functools.partial(_ls_kernel, smooth_val=smooth_val,
                                   confidence=float(confidence))
        loss_parts = pl.pallas_call(
            kernel,
            out_shape=acc_shape,
            grid_spec=pltpu.PrefetchScalarGridSpec(
                num_scalar_prefetch=0,
                grid=grid,
                in_specs=[pred_spec, tgt_spec],
                out_specs=acc_spec),
            compiler_params=compiler_params,
        )(pred, tgt2d)
        # sum(weight[target]) == N when weight is all-ones.
        return jnp.sum(loss_parts[:, 0, 0]) / jnp.float32(N)

    weight2d = jnp.asarray(weight, jnp.float32).reshape(1, C)
    kernel = functools.partial(_ls_kernel_weighted, smooth_val=smooth_val,
                               confidence=float(confidence))
    loss_parts, wsum_parts = pl.pallas_call(
        kernel,
        out_shape=(acc_shape, acc_shape),
        grid_spec=pltpu.PrefetchScalarGridSpec(
            num_scalar_prefetch=0,
            grid=grid,
            in_specs=[pred_spec, tgt_spec,
                      pl.BlockSpec((1, C), lambda p, i: (0, 0))],
            out_specs=[acc_spec, acc_spec]),
        compiler_params=compiler_params,
    )(pred, tgt2d, weight2d)
    return jnp.sum(loss_parts[:, 0, 0]) / jnp.sum(wsum_parts[:, 0, 0])


def _reference(pred, target, classes, weight, smoothing):
    """Pure-JAX reference matching the PyTorch module (float32)."""
    confidence = 1.0 - smoothing
    logp = jax.nn.log_softmax(pred.astype(jnp.float32), axis=-1)
    true_dist = jnp.full_like(logp, smoothing / (classes - 1))
    true_dist = true_dist.at[jnp.arange(pred.shape[0]), target].set(confidence)
    if weight is None:
        weight = jnp.ones((classes,), jnp.float32)
    w = weight[target]
    weighted_loss = jnp.sum(-true_dist * logp, axis=-1) * w
    return jnp.mean(weighted_loss) * w.size / jnp.sum(w)


if __name__ == "__main__":
    key = jax.random.PRNGKey(0)
    N, C = 16, 10
    smoothing = 0.1
    k1, k2, k3, k4, k5 = jax.random.split(key, 5)
    pred = jax.random.normal(k1, (N, C), dtype=jnp.float32)
    target = jax.random.randint(k2, (N,), 0, C, dtype=jnp.int32)

    # Unweighted path (matches the module's default weight=None behavior).
    out = label_smoothing_loss(pred, target, classes=C, smoothing=smoothing)
    out = jax.block_until_ready(out)
    ref = _reference(pred, target, C, None, smoothing)
    assert jnp.allclose(out, ref, atol=1e-5, rtol=1e-5), (out, ref)

    # Weighted path.
    wvec = jax.random.uniform(k3, (C,), jnp.float32, 0.5, 1.5)
    out_w = label_smoothing_loss(pred, target, classes=C, weight=wvec,
                                 smoothing=smoothing)
    out_w = jax.block_until_ready(out_w)
    ref_w = _reference(pred, target, C, wvec, smoothing)
    assert jnp.allclose(out_w, ref_w, atol=1e-5, rtol=1e-5), (out_w, ref_w)

    # Non-multiple N exercises the padding + target==-1 masking path.
    out_p = label_smoothing_loss(pred[:13], target[:13], classes=C,
                                 smoothing=smoothing)
    out_p = jax.block_until_ready(out_p)
    ref_p = _reference(pred[:13], target[:13], C, None, smoothing)
    assert jnp.allclose(out_p, ref_p, atol=1e-5, rtol=1e-5), (out_p, ref_p)

    # Multi-step grid (forced small block_n) exercises resident accumulation
    # across the "arbitrary" axis on both partials.
    N2, C2 = 64, 128
    pred2 = jax.random.normal(k4, (N2, C2), dtype=jnp.float32)
    target2 = jax.random.randint(k5, (N2,), 0, C2, dtype=jnp.int32)
    out_m = label_smoothing_loss(pred2, target2, classes=C2,
                                 smoothing=smoothing, block_n=8)
    out_m = jax.block_until_ready(out_m)
    ref_m = _reference(pred2, target2, C2, None, smoothing)
    assert jnp.allclose(out_m, ref_m, atol=1e-5, rtol=1e-5), (out_m, ref_m)

    print("KERNEL_OK")
</pallas_src>

<mosaic_0001>
module attributes {stable_mosaic.version = 11 : i64} {
  func.func @_ls_kernel(%arg0: i32, %arg1: i32, %arg2: memref<8x10xf32, #tpu.memory_space<vmem>>, %arg3: memref<8x1xi32, #tpu.memory_space<vmem>>, %arg4: memref<1x8x128xf32, #tpu.memory_space<vmem>>) attributes {dimension_semantics = [#tpu.dimension_semantics<parallel>, #tpu.dimension_semantics<arbitrary>], iteration_bounds = array<i64: 2, 1>, scalar_prefetch = 0 : i64, scratch_operands = 0 : i64, tpu.core_type = #tpu.core_type<tc>, window_params = [{transform_indices = @transform_0, window_bounds = array<i64: 8, 10>}, {transform_indices = @transform_1, window_bounds = array<i64: 8, 1>}, {transform_indices = @transform_2, window_bounds = array<i64: 1, 8, 128>}]} {
    %c0_i32 = arith.constant 0 : i32
    %0 = arith.cmpi eq, %arg1, %c0_i32 : i32
    %1 = arith.extui %0 : i1 to i32
    %c0_i32_0 = arith.constant 0 : i32
    %2 = arith.cmpi ne, %1, %c0_i32_0 : i32
    scf.if %2 {
      %cst_16 = arith.constant 0.000000e+00 : f32
      %38 = vector.broadcast %cst_16 : f32 to vector<1x8x128xf32>
      %c0_17 = arith.constant 0 : index
      %c0_18 = arith.constant 0 : index
      %c0_19 = arith.constant 0 : index
      %39 = vector.load %arg4[%c0_17, %c0_18, %c0_19] : memref<1x8x128xf32, #tpu.memory_space<vmem>>, vector<1x8x128xf32>
      tpu.vector_store %arg4[%c0_17, %c0_18, %c0_19], %38 {strides = array<i32>} : memref<1x8x128xf32, #tpu.memory_space<vmem>>, vector<1x8x128xf32>,
    } else {
    }
    %c0 = arith.constant 0 : index
    %c0_1 = arith.constant 0 : index
    %3 = vector.load %arg2[%c0, %c0_1] : memref<8x10xf32, #tpu.memory_space<vmem>>, vector<8x10xf32>
    %c0_2 = arith.constant 0 : index
    %c0_3 = arith.constant 0 : index
    %4 = vector.load %arg3[%c0_2, %c0_3] : memref<8x1xi32, #tpu.memory_space<vmem>>, vector<8x1xi32>
    %cst = arith.constant dense<0xFF800000> : vector<8xf32>
    %5 = vector.multi_reduction <maximumf>, %3, %cst [1] : vector<8x10xf32> to vector<8xf32>
    %6 = vector.shape_cast %5 : vector<8xf32> to vector<8x1xf32>
    %7 = vector.broadcast %6 : vector<8x1xf32> to vector<8x10xf32>
    %8 = arith.subf %3, %7 : vector<8x10xf32>
    %9 = math.exp %8 : vector<8x10xf32>
    %cst_4 = arith.constant dense<0.000000e+00> : vector<8xf32>
    %10 = vector.multi_reduction <add>, %9, %cst_4 [1] : vector<8x10xf32> to vector<8xf32>
    %11 = vector.shape_cast %10 : vector<8xf32> to vector<8x1xf32>
    %12 = math.log %11 : vector<8x1xf32>
    %13 = arith.addf %12, %6 : vector<8x1xf32>
    %14 = tpu.iota {dimensions = array<i32: 1>} : vector<1x10xi32>
    %15 = vector.broadcast %14 : vector<1x10xi32> to vector<8x10xi32>
    %16 = vector.broadcast %4 : vector<8x1xi32> to vector<8x10xi32>
    %17 = arith.cmpi eq, %15, %16 : vector<8x10xi32>
    %cst_5 = arith.constant 0.899999976 : f32
    %cst_6 = arith.constant 0.0111111114 : f32
    %18 = vector.broadcast %cst_5 : f32 to vector<8x10xf32>
    %19 = vector.broadcast %cst_6 : f32 to vector<8x10xf32>
    %20 = arith.select %17, %18, %19 : vector<8x10xi1>, vector<8x10xf32>
    %21 = arith.mulf %20, %3 : vector<8x10xf32>
    %cst_7 = arith.constant dense<0.000000e+00> : vector<8xf32>
    %22 = vector.multi_reduction <add>, %21, %cst_7 [1] : vector<8x10xf32> to vector<8xf32>
    %23 = vector.shape_cast %22 : vector<8xf32> to vector<8x1xf32>
    %24 = arith.subf %13, %23 : vector<8x1xf32>
    %c0_i32_8 = arith.constant 0 : i32
    %25 = vector.broadcast %c0_i32_8 : i32 to vector<8x1xi32>
    %26 = arith.cmpi sge, %4, %25 : vector<8x1xi32>
    %27 = arith.extui %26 : vector<8x1xi1> to vector<8x1xi32>
    %28 = arith.sitofp %27 : vector<8x1xi32> to vector<8x1xf32>
    %c0_9 = arith.constant 0 : index
    %c0_10 = arith.constant 0 : index
    %c0_11 = arith.constant 0 : index
    %29 = vector.load %arg4[%c0_9, %c0_10, %c0_11] : memref<1x8x128xf32, #tpu.memory_space<vmem>>, vector<1x8x128xf32>
    %30 = arith.mulf %24, %28 : vector<8x1xf32>
    %31 = vector.shape_cast %30 : vector<8x1xf32> to vector<1x8x1xf32>
    %cst_12 = arith.constant dense<0.000000e+00> : vector<1xf32>
    %32 = vector.multi_reduction <add>, %31, %cst_12 [1, 2] : vector<1x8x1xf32> to vector<1xf32>
    %33 = vector.shape_cast %32 : vector<1xf32> to vector<1x1x1xf32>
    %34 = vector.extract %33[0, 0, 0] : f32 from vector<1x1x1xf32>
    %35 = vector.broadcast %34 : f32 to vector<1x8x128xf32>
    %36 = arith.addf %29, %35 : vector<1x8x128xf32>
    %c0_13 = arith.constant 0 : index
    %c0_14 = arith.constant 0 : index
    %c0_15 = arith.constant 0 : index
    %37 = vector.load %arg4[%c0_13, %c0_14, %c0_15] : memref<1x8x128xf32, #tpu.memory_space<vmem>>, vector<1x8x128xf32>
    tpu.vector_store %arg4[%c0_13, %c0_14, %c0_15], %36 {strides = array<i32>} : memref<1x8x128xf32, #tpu.memory_space<vmem>>, vector<1x8x128xf32>,
    return
  }
  func.func @transform_0(%arg0: i32, %arg1: i32) -> (i32, i32) {
    %c1_i32 = arith.constant 1 : i32
    %0 = arith.muli %arg0, %c1_i32 : i32
    %1 = arith.addi %0, %arg1 : i32
    %c0_i32 = arith.constant 0 : i32
    %c0_i32_0 = arith.constant 0 : i32
    return %1, %c0_i32 : i32, i32
  }
  func.func @transform_1(%arg0: i32, %arg1: i32) -> (i32, i32) {
    %c1_i32 = arith.constant 1 : i32
    %0 = arith.muli %arg0, %c1_i32 : i32
    %1 = arith.addi %0, %arg1 : i32
    %c0_i32 = arith.constant 0 : i32
    %c0_i32_0 = arith.constant 0 : i32
    return %1, %c0_i32 : i32, i32
  }
  func.func @transform_2(%arg0: i32, %arg1: i32) -> (i32, i32, i32) {
    %c0_i32 = arith.constant 0 : i32
    %c0_i32_0 = arith.constant 0 : i32
    %c0_i32_1 = arith.constant 0 : i32
    return %arg0, %c0_i32, %c0_i32_0 : i32, i32, i32
  }
}

</mosaic_0001>

<llo_original>
// kernel: tpu_custom_call.1
$region0: #{tpu_custom_call.1}
  #allocation0 [shape = 'u32[]', space=smem, size = 0x4, offset = 0x4, fixed_abs, tag = 'smem constant byte address 0x4 - core index']
  #allocation1 [shape = 'u32[144,128]{1,0:T(1,128)}', space=vmem, size = 0x12000, scoped, tag = 'internal scratch']
  %s0 = inlined_call_operand.vmem [shape: f32[16,10], index: 0, kind: input, shape index: {}]
  %s1 = inlined_call_operand.vmem [shape: s32[16,1], index: 1, kind: input, shape index: {}]
  %s2 = inlined_call_operand.hbm [shape: f32[2,8,128], index: 2, kind: output, shape index: {}]
  %s3 = sld [smem:[#allocation0]]
  $region45: #{tpu_custom_call.1} parent=0
    _
  %s5 = ssub.s32 1, %s3
  %s6 = scalar_select 0, %s5, %s3
  $region1: #{tpu_custom_call.1} parent=0
    #allocation2 [shape = 'u8[8192]{0}', space=vmem, size = 0x2000, scoped, tag = 'output window, operand 0']
    #allocation3 [shape = 's32[2]{0}', space=sflag, size = 0x8, scoped, tag = 'scoped memory for tpu_custom_call.1']
    %7 = vsyncpa [#allocation3], 0
    %s8 = scalar_lea.sflag [#allocation3], 1
    %9 = vsyncpa %s8, 0
    loop: start=0, step=1, limit=4
    $region2: #{tpu_custom_call.1} parent=1 // loop_pre_header
      _
    $region3: #{tpu_custom_call.1} parent=1 // loop_header
      %s11 = sphi 0, %s15
      %p12 = scmp.ge.s32.totalorder %s11, 4
      %s18 = sphi 0, %s30
      %s19 = sphi 0, %s26
      %s20 = sphi 0, %s18
      %s21 = sphi 0, %s19
      %s22 = sphi 0, %s20
      %s23 = sphi 0, %s21
      %s35 = sphi 0, %s37
      %s38 = sphi 0, %s35
      %s39 = sphi 0, %s38
      %s55 = sphi 0, %s39
      %s63 = sphi 0, %s65
      %s66 = sphi 0, %s63
      %s67 = sphi 0, %s66
      %s83 = sphi 0, %s67
      %s89 = sphi 0, %s91
      %s92 = sphi 0, %s89
      %s93 = sphi 0, %s92
      %s109 = sphi 0, %s93
    $region4: #{tpu_custom_call.1} parent=1 // loop_header_branch
      %14 = sbr.rel (%p12) target = $region8
    $region5: #{tpu_custom_call.1} parent=1 // loop_body
      %s16 = ssub.s32 %s11, 1
      %s17 = ssub.s32 %s11, 2
      %s24 = sadd.s32 1, %s19
      %p25 = scmp.ge.s32.totalorder %s24, 1
      %s26 = scalar_select %p25, 0, %s24
      %s27 = sadd.s32 1, %s18
      %s28 = scalar_select %p25, %s27, %s18
      %p29 = scmp.ge.s32.totalorder %s28, 2
      %s30 = scalar_select %p29, 0, %s28
      %s31 = sadd.s32 %s18, %s19
      %s32 = sadd.s32 %s30, %s26
      %s33 = ssub.s32 %s31, %s32
      %p34 = scmp.eq.s32.totalorder %s33, 0
      %s36 = sadd.s32 %s35, 1
      %s37 = scalar_select %p34, %s35, %s36
      %p40 = pneg %p34
      %p41 = scmp.eq.s32.totalorder %s11, 1
      %p42 = por %p40, %p41
      %p43 = scmp.ne.s32.totalorder %s35, %s38
      %p44 = scmp.eq.s32.totalorder %s11, 0
      %p45 = por %p43, %p44
      %p46 = scmp.ne.s32.totalorder %s35, %s38
      %p47 = scmp.eq.s32.totalorder %s16, 1
      %p48 = por %p46, %p47
      %p49 = scmp.ne.s32.totalorder %s38, %s39
      %p50 = scmp.eq.s32.totalorder %s16, 0
      %p51 = por %p49, %p50
      %p52 = scmp.ne.s32.totalorder %s38, %s39
      %p53 = scmp.eq.s32.totalorder %s17, 1
      %p54 = por %p52, %p53
      %p56 = scmp.ne.s32.totalorder %s39, %s55
      %p57 = scmp.eq.s32.totalorder %s17, 0
      %p58 = por %p56, %p57
      %s59 = sadd.s32 %s18, %s19
      %s60 = sadd.s32 %s30, %s26
      %s61 = ssub.s32 %s59, %s60
      %p62 = scmp.eq.s32.totalorder %s61, 0
      %s64 = sadd.s32 %s63, 1
      %s65 = scalar_select %p62, %s63, %s64
      %p68 = pneg %p62
      %p69 = scmp.eq.s32.totalorder %s11, 1
      %p70 = por %p68, %p69
      %p71 = scmp.ne.s32.totalorder %s63, %s66
      %p72 = scmp.eq.s32.totalorder %s11, 0
      %p73 = por %p71, %p72
      %p74 = scmp.ne.s32.totalorder %s63, %s66
      %p75 = scmp.eq.s32.totalorder %s16, 1
      %p76 = por %p74, %p75
      %p77 = scmp.ne.s32.totalorder %s66, %s67
      %p78 = scmp.eq.s32.totalorder %s16, 0
      %p79 = por %p77, %p78
      %p80 = scmp.ne.s32.totalorder %s66, %s67
      %p81 = scmp.eq.s32.totalorder %s17, 1
      %p82 = por %p80, %p81
      %p84 = scmp.ne.s32.totalorder %s67, %s83
      %p85 = scmp.eq.s32.totalorder %s17, 0
      %p86 = por %p84, %p85
      %s87 = ssub.s32 %s18, %s30
      %p88 = scmp.eq.s32.totalorder %s87, 0
      %s90 = sadd.s32 %s89, 1
      %s91 = scalar_select %p88, %s89, %s90
      %p94 = pneg %p88
      %p95 = scmp.eq.s32.totalorder %s11, 1
      %p96 = por %p94, %p95
      %p97 = scmp.ne.s32.totalorder %s89, %s92
      %p98 = scmp.eq.s32.totalorder %s11, 0
      %p99 = por %p97, %p98
      %p100 = scmp.ne.s32.totalorder %s89, %s92
      %p101 = scmp.eq.s32.totalorder %s16, 1
      %p102 = por %p100, %p101
      %p103 = scmp.ne.s32.totalorder %s92, %s93
      %p104 = scmp.eq.s32.totalorder %s16, 0
      %p105 = por %p103, %p104
      %p106 = scmp.ne.s32.totalorder %s92, %s93
      %p107 = scmp.eq.s32.totalorder %s17, 1
      %p108 = por %p106, %p107
      %p110 = scmp.ne.s32.totalorder %s93, %s109
      %p111 = scmp.eq.s32.totalorder %s17, 0
      %p112 = por %p110, %p111
      %p113 = scmp.le.s32.totalorder 1, %s11
      %p114 = scmp.lt.s32.totalorder %s11, 3
      %p115 = pnand %p113, %p114
      %p116 = pneg %p115
      // Predicated region
      $region9: #{tpu_custom_call.1} parent=5 // pred_check
        _
      $region10: #{tpu_custom_call.1} parent=5 // pred_check_branch
        %118 = sbr.rel (%p115) target = $region12
      $region11: #{tpu_custom_call.1} parent=5 // pred_region
        %s119 = ssub.s32 %s11, 1
      $region12: #{tpu_custom_call.1} parent=5 // pred_fallthru
        _
      %p120 = scmp.lt.s32.totalorder %s11, 2
      // Predicated region
      $region13: #{tpu_custom_call.1} parent=5 // pred_check
        %p121 = pneg %p120
      $region14: #{tpu_custom_call.1} parent=5 // pred_check_branch
        %123 = sbr.rel (%p121) target = $region16
      $region15: #{tpu_custom_call.1} parent=5 // pred_region
        // Predicated region
        $region17: #{tpu_custom_call.1} parent=15 // pred_check
          %p124 = pneg %p45
        $region18: #{tpu_custom_call.1} parent=15 // pred_check_branch
          %126 = sbr.rel (%p124) target = $region20
        $region19: #{tpu_custom_call.1} parent=15 // pred_region
          %s127 = sadd.s32 %s18, %s19
          %p128 = scmp.lt.s32.totalorder %s127, 1
          %s129 = scalar_select %p128, %s127, 1
          %s130 = smul.addr %s129, 8
          %s131 = scalar_lea.vmem %s0, %s130
          %s132 = sadd.s32 %s18, %s19
        $region20: #{tpu_custom_call.1} parent=15 // pred_fallthru
          _
        // Predicated region
        $region21: #{tpu_custom_call.1} parent=15 // pred_check
          %p133 = pneg %p73
        $region22: #{tpu_custom_call.1} parent=15 // pred_check_branch
          %135 = sbr.rel (%p133) target = $region24
        $region23: #{tpu_custom_call.1} parent=15 // pred_region
          %s136 = sadd.s32 %s18, %s19
          %p137 = scmp.lt.s32.totalorder %s136, 1
          %s138 = scalar_select %p137, %s136, 1
          %s139 = smul.addr %s138, 8
          %s140 = scalar_lea.vmem %s1, %s139
          %s141 = sadd.s32 %s18, %s19
        $region24: #{tpu_custom_call.1} parent=15 // pred_fallthru
          _
      $region16: #{tpu_custom_call.1} parent=5 // pred_fallthru
        _
      %p142 = scmp.le.s32.totalorder 1, %s11
      %p143 = scmp.lt.s32.totalorder %s11, 3
      %p144 = pnand %p142, %p143
      %p145 = pneg %p144
      // Predicated region
      $region25: #{tpu_custom_call.1} parent=5 // pred_check
        _
      $region26: #{tpu_custom_call.1} parent=5 // pred_check_branch
        %147 = sbr.rel (%p144) target = $region28
      $region27: #{tpu_custom_call.1} parent=5 // pred_region
        %s148 = ssub.s32 %s11, 1
        %s149 = sadd.s32 %s20, %s21
        %p150 = scmp.lt.s32.totalorder %s149, 1
        %s151 = scalar_select %p150, %s149, 1
        %s152 = smul.addr %s151, 8
        %s153 = scalar_lea.vmem %s0, %s152
        %p154 = pneg %p51
        %p155 = pneg %p48
        %s156 = sadd.s32 %s20, %s21
        %p157 = scmp.lt.s32.totalorder %s156, 1
        %s158 = scalar_select %p157, %s156, 1
        %s159 = smul.addr %s158, 8
        %s160 = scalar_lea.vmem %s1, %s159
        %p161 = pneg %p79
        %p162 = pneg %p76
        %p163 = pneg %p105
        %p164 = pneg %p102
        %s165 = sand.u32 %s92, 1
        %s166 = scalar_lea.sflag [#allocation3], %s165
        %s167 = sand.u32 %s92, 1
        %s168 = smul.addr %s167, 8
        %s169 = scalar_lea.vmem [#allocation2], %s168
        %s170 = sadd.s32 %s20, %s21
        %p171 = scmp.lt.s32.totalorder %s170, 1
        %s172 = scalar_select %p171, %s170, 1
        %s173 = smul.addr %s172, 8
        %s174 = scalar_lea.vmem %s0, %s173
        %s175 = sadd.s32 %s20, %s21
        %s176 = sadd.s32 %s20, %s21
        %p177 = scmp.lt.s32.totalorder %s176, 1
        %s178 = scalar_select %p177, %s176, 1
        %s179 = smul.addr %s178, 8
        %s180 = scalar_lea.vmem %s1, %s179
        %s181 = sadd.s32 %s20, %s21
        %p182 = scmp.eq.s32.totalorder %s21, 0
        // Predicated region
        $region29: #{tpu_custom_call.1} parent=27 // pred_check
          %p183 = pneg %p182
        $region30: #{tpu_custom_call.1} parent=27 // pred_check_branch
          %185 = sbr.rel (%p183) target = $region32
        $region31: #{tpu_custom_call.1} parent=27 // pred_region
          %186 = vst [vmem:[%s169] sm:$0xff] 0.0
        $region32: #{tpu_custom_call.1} parent=27 // pred_fallthru
          _
        %v187 = vld [vmem:[%s174] sm:$0xff]
        %v188 = vld [vmem:[%s180] sm:$0xff]
        %vm189 = vcmask 80896
        %v190 = vsel %vm189, %v187, -inf
        %191 = vmax.xlane.f32.xlu0 %v190
        %v192 = vpop.xlane.xlu0 %191
        %v193 = vsub.f32 %v187, %v192
        %v194 = vmul.f32 %v193, 1.442695
        %v195 = vpow.pop %v194
        %v196 = vsel %vm189, %v195, 0.0
        %197 = vadd.xlane.f32.xlu0 %v196
        %v198 = vpop.xlane.xlu0 %197
        %v199 = vlog2.pop %v198
        %v200 = vmul.f32 %v199, 0.6931472
        %v201 = vadd.f32 %v200, %v192
        %v202 = vlaneseq
        %v203 = vand.u32 %v202, 127
        %204 = vset.pattern.permute.xlu0 0
        %205 = vperm.xlu0 %204, %v188
        %v206 = vpop.permute.xlu0 %205
        %vm207 = vcmp.eq.s32.totalorder %v203, %v206
        %v208 = vsel %vm207, 0.9, 0.011111111
        %v209 = vmul.f32 %v208, %v187
        %v210 = vsel %vm189, %v209, 0.0
        %211 = vadd.xlane.f32.xlu0 %v210
        %v212 = vpop.xlane.xlu0 %211
        %v213 = vsub.f32 %v201, %v212
        %vm214 = vcmp.ge.s32.totalorder %v188, 0
        %v215 = vsel %vm214, 1, 0
        %v216 = vcvt.s32.f32 %v215
        %v217 = vld [vmem:[%s169] sm:$0xff]
        %v218 = vmul.f32 %v213, %v216
        %vm219 = vcmask 7168
        %v220 = vsel %vm219, %v218, 0.0
        %221 = vadd.xlane.f32.xlu0 %v220
        %v222 = vpop.xlane.xlu0 %221
        %v223 = vrot.slane %v222, 4
        %v224 = vadd.f32 %v222, %v223
        %v225 = vrot.slane %v224, 2
        %v226 = vadd.f32 %v224, %v225
        %v227 = vrot.slane %v226, 1
        %v228 = vadd.f32 %v226, %v227
        %s229 = vtos %v228
        %v230 = vstv %s229
        %v231 = vadd.f32 %v217, %v230
        %232 = vst [vmem:[%s169] sm:$0xff] %v231
        %s233 = sand.u32 %s92, 1
        %s234 = scalar_lea.sflag [#allocation3], %s233
        %s235 = sand.u32 %s92, 1
        %s236 = smul.addr %s235, 8
        %s237 = scalar_lea.vmem [#allocation2], %s236
        // Predicated region
        $region33: #{tpu_custom_call.1} parent=27 // pred_check
          %p238 = pneg %p102
        $region34: #{tpu_custom_call.1} parent=27 // pred_check_branch
          %240 = sbr.rel (%p238) target = $region36
        $region35: #{tpu_custom_call.1} parent=27 // pred_region
          %s242 = ssub.s32 128, 128
          %243 = vsyncadd %s234, %s242
          %s244 = smul.addr %s20, 128
          %s245 = scalar_lea.hbm %s2, %s244
          %s247 = sshll.u32 %s237, 4
          %s248 = int_to_ptr.vmem [resolvable:$true] %s247
          %250 = dma.vmem_to_hbm [thread:$0]  %s248, 128, %s245, %s234
        $region36: #{tpu_custom_call.1} parent=27 // pred_fallthru
          _
      $region28: #{tpu_custom_call.1} parent=5 // pred_fallthru
        _
      %p251 = scmp.le.s32.totalorder 2, %s11
      // Predicated region
      $region37: #{tpu_custom_call.1} parent=5 // pred_check
        %p252 = pneg %p251
      $region38: #{tpu_custom_call.1} parent=5 // pred_check_branch
        %254 = sbr.rel (%p252) target = $region40
      $region39: #{tpu_custom_call.1} parent=5 // pred_region
        %s255 = ssub.s32 %s11, 2
        // Predicated region
        $region41: #{tpu_custom_call.1} parent=39 // pred_check
          %p256 = pneg %p108
        $region42: #{tpu_custom_call.1} parent=39 // pred_check_branch
          %258 = sbr.rel (%p256) target = $region44
        $region43: #{tpu_custom_call.1} parent=39 // pred_region
          %s259 = sand.u32 %s93, 1
          %s260 = scalar_lea.sflag [#allocation3], %s259
          %s261 = sand.u32 %s93, 1
          %s262 = smul.addr %s261, 8
          %s263 = scalar_lea.vmem [#allocation2], %s262
          %264 = dma.done %s260, 128
        $region44: #{tpu_custom_call.1} parent=39 // pred_fallthru
          _
      $region40: #{tpu_custom_call.1} parent=5 // pred_fallthru
        _
    $region6: #{tpu_custom_call.1} parent=1 // loop_footer
      %s15 = sadd.s32 1, %s11
    $region7: #{tpu_custom_call.1} parent=1 // loop_footer_branch
      %10 = sbr.rel target = $region3
    $region8: #{tpu_custom_call.1} parent=1 // loop_exit
      _
    %265 = vsyncpa [#allocation3], 1
    %s266 = scalar_lea.sflag [#allocation3], 1
    %267 = vsyncpa %s266, 1

</llo_original>
